<compile_context>
chip_gen: v7x
topology: tpu7x:2x2x1
jax: 0.10.0
libtpu: 0.0.40
codegen_flags: <defaults>
</compile_context>

<pallas_src>
import functools

import jax
import jax.numpy as jnp
from jax.experimental import pallas as pl
from jax.experimental.pallas import tpu as pltpu


# ---------------------------------------------------------------------------
# Fused kernel: whole generator MLP in one pallas_call
# ---------------------------------------------------------------------------
def _fused_generator_kernel(*refs, num_hidden):
    """refs layout:
        refs[0]                  : x      (B, K0)       f32
        refs[1 + 2*i]            : w_i    (K_i, N_i)    bf16
        refs[2 + 2*i]            : p_i    (3, N_i)      f32   rows = [bias, gamma, beta]
        refs[1 + 2*num_hidden]   : w_out  (N_last, Nout) bf16
        refs[2 + 2*num_hidden]   : b_out  (1, Nout)      f32
        refs[3 + 2*num_hidden]   : o      (B, Nout)      f32  [output]
    """
    h = refs[0][...]                                    # f32 activations
    idx = 1
    for _ in range(num_hidden):
        w_ref, p_ref = refs[idx], refs[idx + 1]
        idx += 2
        # Linear (bf16 operands on the MXU, f32 accumulate) + bias.
        h = jnp.dot(h.astype(jnp.bfloat16), w_ref[...],
                    preferred_element_type=jnp.float32)
        h = h + p_ref[0:1, :]                           # bias: needed, LeakyReLU precedes BN
        # LeakyReLU(negative_slope=0.2): max(h, 0.2*h) is identical for slope < 1.
        h = jnp.maximum(h, 0.2 * h)
        # BatchNorm1d, training mode: per-feature batch mean / biased variance.
        mean = jnp.mean(h, axis=0, keepdims=True)
        diff = h - mean
        var = jnp.mean(diff * diff, axis=0, keepdims=True)
        scale = p_ref[1:2, :] * jax.lax.rsqrt(var + 1e-5)   # gamma folded into rsqrt
        h = diff * scale + p_ref[2:3, :]                    # + beta
    w_out_ref = refs[idx]
    b_out_ref = refs[idx + 1]
    o_ref = refs[idx + 2]
    h = jnp.dot(h.astype(jnp.bfloat16), w_out_ref[...],
                preferred_element_type=jnp.float32) + b_out_ref[...]
    o_ref[...] = jnp.tanh(h).astype(o_ref.dtype)


def fused_generator(x, hidden_layers, w_out, b_out):
    """x: (B, K0) f32; hidden_layers: list of (w_bf16, slab_f32(3,N));
    w_out: (N_last, Nout) bf16; b_out: (1, Nout) f32 -> (B, Nout) f32."""
    B = x.shape[0]
    n_out = w_out.shape[1]

    inputs = [x]
    in_specs = [pl.BlockSpec(x.shape, lambda i: (0, 0))]
    for (w, slab) in hidden_layers:
        inputs.append(w)
        in_specs.append(pl.BlockSpec(w.shape, lambda i: (0, 0)))
        inputs.append(slab)
        in_specs.append(pl.BlockSpec(slab.shape, lambda i: (0, 0)))
    inputs.append(w_out)
    in_specs.append(pl.BlockSpec(w_out.shape, lambda i: (0, 0)))
    inputs.append(b_out)
    in_specs.append(pl.BlockSpec(b_out.shape, lambda i: (0, 0)))

    kernel = functools.partial(_fused_generator_kernel,
                               num_hidden=len(hidden_layers))

    return pl.pallas_call(
        kernel,
        out_shape=jax.ShapeDtypeStruct((B, n_out), jnp.float32),
        grid_spec=pltpu.PrefetchScalarGridSpec(
            num_scalar_prefetch=0,
            grid=(1,),
            in_specs=in_specs,
            out_specs=pl.BlockSpec((B, n_out), lambda i: (0, 0)),
        ),
        # Single grid step (whole batch resident): BN needs full-batch stats,
        # so no batch tiling at this size.  "arbitrary" is the honest marking.
        # TODO(synk): for large training batches on v7x, split the batch over the
        # two TensorCores and do a cross-core partial-sum BN reduce.
        compiler_params=pltpu.CompilerParams(
            dimension_semantics=("arbitrary",)),
    )(*inputs)


# ---------------------------------------------------------------------------
# Parameter construction (deterministic, mirrors module __init__ shapes)
# ---------------------------------------------------------------------------
def _hidden_widths(num_hidden_layers):
    # torch.linspace(256, 256*L, L).int(): step is exactly 256, so widths are 256*(i+1).
    return [256 * (i + 1) for i in range(num_hidden_layers)]


def make_generator_params(key, size_latent, size_labels, num_hidden_layers,
                          size_outputs):
    hidden = _hidden_widths(num_hidden_layers)
    params = {}
    key, ek = jax.random.split(key)
    # nn.Embedding default init ~ N(0, 1)
    params["emb"] = jax.random.normal(ek, (size_labels, size_labels),
                                      dtype=jnp.float32)

    # Weights generated as (in, out); PyTorch stores (out, in) -- transpose if
    # loading real torch checkpoints.
    in_sizes = [size_latent + size_labels] + hidden[:-1]
    layers = []
    for fin, fout in zip(in_sizes, hidden):
        key, wk, bk = jax.random.split(key, 3)
        bound = 1.0 / jnp.sqrt(jnp.float32(fin))
        w = jax.random.uniform(wk, (fin, fout), jnp.float32, -bound, bound)
        b = jax.random.uniform(bk, (1, fout), jnp.float32, -bound, bound)
        gamma = jnp.ones((1, fout), jnp.float32)   # BatchNorm1d default affine
        beta = jnp.zeros((1, fout), jnp.float32)
        layers.append((w, b, gamma, beta))
    params["hidden"] = layers

    key, wk, bk = jax.random.split(key, 3)
    fin = hidden[-1]
    bound = 1.0 / jnp.sqrt(jnp.float32(fin))
    params["w_out"] = jax.random.uniform(wk, (fin, size_outputs), jnp.float32,
                                         -bound, bound)
    params["b_out"] = jax.random.uniform(bk, (1, size_outputs), jnp.float32,
                                         -bound, bound)
    return params


def prepare_params_for_tpu(params):
    """One-time (outside jit) conversion for the fused kernel:
       * matmul weights cast to bf16 (halves the dominant DMA, bf16 MXU path),
       * per-layer (bias, gamma, beta) packed into one (3, N) f32 slab,
       * no lane padding anywhere (full-dims blocks are legal)."""
    hidden = []
    for (w, b, g, be) in params["hidden"]:
        slab = jnp.concatenate([b, g, be], axis=0)         # (3, N) f32
        hidden.append((w.astype(jnp.bfloat16), slab))
    return {"emb": params["emb"],
            "hidden": hidden,
            "w_out": params["w_out"].astype(jnp.bfloat16),
            "b_out": params["b_out"]}


# ---------------------------------------------------------------------------
# Forward pass
# ---------------------------------------------------------------------------
@jax.jit
def generator_forward(tpu_params, latent_vector, labels):
    # Embedding lookup (tiny gather) + concat: plain-JAX glue, one trivial dispatch.
    emb = jnp.take(tpu_params["emb"], labels, axis=0)          # (B, size_labels)
    x = jnp.concatenate([emb, latent_vector], axis=-1)         # (B, labels+latent)
    x = x.astype(jnp.float32)
    return fused_generator(x, tpu_params["hidden"],
                           tpu_params["w_out"], tpu_params["b_out"])


# ---------------------------------------------------------------------------
# Pure-JAX reference (same bf16 weights, all math in f32) for a sanity check.
# ---------------------------------------------------------------------------
def reference_forward(tpu_params, latent_vector, labels):
    emb = jnp.take(tpu_params["emb"], labels, axis=0)
    h = jnp.concatenate([emb, latent_vector], axis=-1).astype(jnp.float32)
    for (w, slab) in tpu_params["hidden"]:
        h = h @ w.astype(jnp.float32) + slab[0:1, :]
        h = jnp.where(h >= 0, h, 0.2 * h)
        mean = jnp.mean(h, axis=0, keepdims=True)
        var = jnp.mean((h - mean) ** 2, axis=0, keepdims=True)
        h = (h - mean) * jax.lax.rsqrt(var + 1e-5)
        h = h * slab[1:2, :] + slab[2:3, :]
    h = h @ tpu_params["w_out"].astype(jnp.float32) + tpu_params["b_out"]
    return jnp.tanh(h)


# ---------------------------------------------------------------------------
if __name__ == "__main__":
    size_latent = 32
    size_labels = 10
    num_hidden_layers = 2       # hidden widths -> [256, 512]
    size_outputs = 16
    batch = 8

    key = jax.random.PRNGKey(0)
    pkey, lkey, ykey = jax.random.split(key, 3)

    params = make_generator_params(pkey, size_latent, size_labels,
                                   num_hidden_layers, size_outputs)
    tpu_params = prepare_params_for_tpu(params)

    latent = jax.random.normal(lkey, (batch, size_latent), dtype=jnp.float32)
    labels = jax.random.randint(ykey, (batch,), 0, size_labels, dtype=jnp.int32)

    out = generator_forward(tpu_params, latent, labels)
    out = jax.block_until_ready(out)

    assert out.shape == (batch, size_outputs)
    assert bool(jnp.all(jnp.isfinite(out)))
    assert bool(jnp.all(jnp.abs(out) <= 1.0))   # tanh range sanity check

    ref = reference_forward(tpu_params, latent, labels)
    max_err = float(jnp.max(jnp.abs(out - ref)))
    assert max_err < 0.1, f"max abs error vs reference too large: {max_err}"

    print("KERNEL_OK")
</pallas_src>

<mosaic_0001>
module attributes {stable_mosaic.version = 11 : i64} {
  func.func @_fused_generator_kernel(%arg0: i32, %arg1: memref<8x42xf32, #tpu.memory_space<vmem>>, %arg2: memref<42x256xbf16, #tpu.memory_space<vmem>>, %arg3: memref<3x256xf32, #tpu.memory_space<vmem>>, %arg4: memref<256x512xbf16, #tpu.memory_space<vmem>>, %arg5: memref<3x512xf32, #tpu.memory_space<vmem>>, %arg6: memref<512x16xbf16, #tpu.memory_space<vmem>>, %arg7: memref<1x16xf32, #tpu.memory_space<vmem>>, %arg8: memref<8x16xf32, #tpu.memory_space<vmem>>) attributes {dimension_semantics = [#tpu.dimension_semantics<arbitrary>], iteration_bounds = array<i64: 1>, scalar_prefetch = 0 : i64, scratch_operands = 0 : i64, tpu.core_type = #tpu.core_type<tc>, window_params = [{pipeline_mode = #tpu.pipeline_mode<synchronous>, transform_indices = @transform_0, window_bounds = array<i64: 8, 42>}, {pipeline_mode = #tpu.pipeline_mode<synchronous>, transform_indices = @transform_1, window_bounds = array<i64: 42, 256>}, {pipeline_mode = #tpu.pipeline_mode<synchronous>, transform_indices = @transform_2, window_bounds = array<i64: 3, 256>}, {pipeline_mode = #tpu.pipeline_mode<synchronous>, transform_indices = @transform_3, window_bounds = array<i64: 256, 512>}, {pipeline_mode = #tpu.pipeline_mode<synchronous>, transform_indices = @transform_4, window_bounds = array<i64: 3, 512>}, {pipeline_mode = #tpu.pipeline_mode<synchronous>, transform_indices = @transform_5, window_bounds = array<i64: 512, 16>}, {pipeline_mode = #tpu.pipeline_mode<synchronous>, transform_indices = @transform_6, window_bounds = array<i64: 1, 16>}, {pipeline_mode = #tpu.pipeline_mode<synchronous>, transform_indices = @transform_7, window_bounds = array<i64: 8, 16>}]} {
    %c0 = arith.constant 0 : index
    %c0_0 = arith.constant 0 : index
    %0 = vector.load %arg1[%c0, %c0_0] : memref<8x42xf32, #tpu.memory_space<vmem>>, vector<8x42xf32>
    %1 = arith.truncf %0 : vector<8x42xf32> to vector<8x42xbf16>
    %c0_1 = arith.constant 0 : index
    %c0_2 = arith.constant 0 : index
    %2 = vector.load %arg2[%c0_1, %c0_2] : memref<42x256xbf16, #tpu.memory_space<vmem>>, vector<42x256xbf16>
    %cst = arith.constant dense<0.000000e+00> : vector<8x256xf32>
    %3 = tpu.matmul %1, %2, %cst {dimension_numbers = #tpu.dot_dimension_numbers<[1], [0], [0], [1], [0, 0, 1, 1], [], []>} : vector<8x42xbf16>, vector<42x256xbf16>, vector<8x256xf32> -> vector<8x256xf32>
    %c0_3 = arith.constant 0 : index
    %c0_4 = arith.constant 0 : index
    %4 = vector.load %arg3[%c0_3, %c0_4] : memref<3x256xf32, #tpu.memory_space<vmem>>, vector<1x256xf32>
    %5 = vector.broadcast %4 : vector<1x256xf32> to vector<8x256xf32>
    %6 = arith.addf %3, %5 : vector<8x256xf32>
    %cst_5 = arith.constant 2.000000e-01 : f32
    %7 = vector.broadcast %cst_5 : f32 to vector<8x256xf32>
    %8 = arith.mulf %7, %6 : vector<8x256xf32>
    %9 = arith.maximumf %6, %8 : vector<8x256xf32>
    %cst_6 = arith.constant dense<0.000000e+00> : vector<256xf32>
    %10 = vector.multi_reduction <add>, %9, %cst_6 [0] : vector<8x256xf32> to vector<256xf32>
    %11 = vector.shape_cast %10 : vector<256xf32> to vector<1x256xf32>
    %cst_7 = arith.constant 8.000000e+00 : f32
    %12 = vector.broadcast %cst_7 : f32 to vector<1x256xf32>
    %13 = arith.divf %11, %12 : vector<1x256xf32>
    %14 = vector.broadcast %13 : vector<1x256xf32> to vector<8x256xf32>
    %15 = arith.subf %9, %14 : vector<8x256xf32>
    %16 = arith.mulf %15, %15 : vector<8x256xf32>
    %cst_8 = arith.constant dense<0.000000e+00> : vector<256xf32>
    %17 = vector.multi_reduction <add>, %16, %cst_8 [0] : vector<8x256xf32> to vector<256xf32>
    %18 = vector.shape_cast %17 : vector<256xf32> to vector<1x256xf32>
    %cst_9 = arith.constant 8.000000e+00 : f32
    %19 = vector.broadcast %cst_9 : f32 to vector<1x256xf32>
    %20 = arith.divf %18, %19 : vector<1x256xf32>
    %c1 = arith.constant 1 : index
    %c0_10 = arith.constant 0 : index
    %21 = vector.load %arg3[%c1, %c0_10] : memref<3x256xf32, #tpu.memory_space<vmem>>, vector<1x256xf32>
    %cst_11 = arith.constant 9.99999974E-6 : f32
    %22 = vector.broadcast %cst_11 : f32 to vector<1x256xf32>
    %23 = arith.addf %20, %22 : vector<1x256xf32>
    %24 = math.rsqrt %23 : vector<1x256xf32>
    %25 = arith.mulf %21, %24 : vector<1x256xf32>
    %26 = vector.broadcast %25 : vector<1x256xf32> to vector<8x256xf32>
    %27 = arith.mulf %15, %26 : vector<8x256xf32>
    %c2 = arith.constant 2 : index
    %c0_12 = arith.constant 0 : index
    %28 = vector.load %arg3[%c2, %c0_12] : memref<3x256xf32, #tpu.memory_space<vmem>>, vector<1x256xf32>
    %29 = vector.broadcast %28 : vector<1x256xf32> to vector<8x256xf32>
    %30 = arith.addf %27, %29 : vector<8x256xf32>
    %31 = arith.truncf %30 : vector<8x256xf32> to vector<8x256xbf16>
    %c0_13 = arith.constant 0 : index
    %c0_14 = arith.constant 0 : index
    %32 = vector.load %arg4[%c0_13, %c0_14] : memref<256x512xbf16, #tpu.memory_space<vmem>>, vector<256x512xbf16>
    %cst_15 = arith.constant dense<0.000000e+00> : vector<8x512xf32>
    %33 = tpu.matmul %31, %32, %cst_15 {dimension_numbers = #tpu.dot_dimension_numbers<[1], [0], [0], [1], [0, 0, 1, 1], [], []>} : vector<8x256xbf16>, vector<256x512xbf16>, vector<8x512xf32> -> vector<8x512xf32>
    %c0_16 = arith.constant 0 : index
    %c0_17 = arith.constant 0 : index
    %34 = vector.load %arg5[%c0_16, %c0_17] : memref<3x512xf32, #tpu.memory_space<vmem>>, vector<1x512xf32>
    %35 = vector.broadcast %34 : vector<1x512xf32> to vector<8x512xf32>
    %36 = arith.addf %33, %35 : vector<8x512xf32>
    %cst_18 = arith.constant 2.000000e-01 : f32
    %37 = vector.broadcast %cst_18 : f32 to vector<8x512xf32>
    %38 = arith.mulf %37, %36 : vector<8x512xf32>
    %39 = arith.maximumf %36, %38 : vector<8x512xf32>
    %cst_19 = arith.constant dense<0.000000e+00> : vector<512xf32>
    %40 = vector.multi_reduction <add>, %39, %cst_19 [0] : vector<8x512xf32> to vector<512xf32>
    %41 = vector.shape_cast %40 : vector<512xf32> to vector<1x512xf32>
    %cst_20 = arith.constant 8.000000e+00 : f32
    %42 = vector.broadcast %cst_20 : f32 to vector<1x512xf32>
    %43 = arith.divf %41, %42 : vector<1x512xf32>
    %44 = vector.broadcast %43 : vector<1x512xf32> to vector<8x512xf32>
    %45 = arith.subf %39, %44 : vector<8x512xf32>
    %46 = arith.mulf %45, %45 : vector<8x512xf32>
    %cst_21 = arith.constant dense<0.000000e+00> : vector<512xf32>
    %47 = vector.multi_reduction <add>, %46, %cst_21 [0] : vector<8x512xf32> to vector<512xf32>
    %48 = vector.shape_cast %47 : vector<512xf32> to vector<1x512xf32>
    %cst_22 = arith.constant 8.000000e+00 : f32
    %49 = vector.broadcast %cst_22 : f32 to vector<1x512xf32>
    %50 = arith.divf %48, %49 : vector<1x512xf32>
    %c1_23 = arith.constant 1 : index
    %c0_24 = arith.constant 0 : index
    %51 = vector.load %arg5[%c1_23, %c0_24] : memref<3x512xf32, #tpu.memory_space<vmem>>, vector<1x512xf32>
    %cst_25 = arith.constant 9.99999974E-6 : f32
    %52 = vector.broadcast %cst_25 : f32 to vector<1x512xf32>
    %53 = arith.addf %50, %52 : vector<1x512xf32>
    %54 = math.rsqrt %53 : vector<1x512xf32>
    %55 = arith.mulf %51, %54 : vector<1x512xf32>
    %56 = vector.broadcast %55 : vector<1x512xf32> to vector<8x512xf32>
    %57 = arith.mulf %45, %56 : vector<8x512xf32>
    %c2_26 = arith.constant 2 : index
    %c0_27 = arith.constant 0 : index
    %58 = vector.load %arg5[%c2_26, %c0_27] : memref<3x512xf32, #tpu.memory_space<vmem>>, vector<1x512xf32>
    %59 = vector.broadcast %58 : vector<1x512xf32> to vector<8x512xf32>
    %60 = arith.addf %57, %59 : vector<8x512xf32>
    %61 = arith.truncf %60 : vector<8x512xf32> to vector<8x512xbf16>
    %c0_28 = arith.constant 0 : index
    %c0_29 = arith.constant 0 : index
    %62 = vector.load %arg6[%c0_28, %c0_29] : memref<512x16xbf16, #tpu.memory_space<vmem>>, vector<512x16xbf16>
    %cst_30 = arith.constant dense<0.000000e+00> : vector<8x16xf32>
    %63 = tpu.matmul %61, %62, %cst_30 {dimension_numbers = #tpu.dot_dimension_numbers<[1], [0], [0], [1], [0, 0, 1, 1], [], []>} : vector<8x512xbf16>, vector<512x16xbf16>, vector<8x16xf32> -> vector<8x16xf32>
    %c0_31 = arith.constant 0 : index
    %c0_32 = arith.constant 0 : index
    %64 = vector.load %arg7[%c0_31, %c0_32] : memref<1x16xf32, #tpu.memory_space<vmem>>, vector<1x16xf32>
    %65 = vector.broadcast %64 : vector<1x16xf32> to vector<8x16xf32>
    %66 = arith.addf %63, %65 : vector<8x16xf32>
    %67 = math.tanh %66 : vector<8x16xf32>
    %c0_33 = arith.constant 0 : index
    %c0_34 = arith.constant 0 : index
    %68 = vector.load %arg8[%c0_33, %c0_34] : memref<8x16xf32, #tpu.memory_space<vmem>>, vector<8x16xf32>
    tpu.vector_store %arg8[%c0_33, %c0_34], %67 {strides = array<i32>} : memref<8x16xf32, #tpu.memory_space<vmem>>, vector<8x16xf32>,
    return
  }
  func.func @transform_0(%arg0: i32) -> (i32, i32) {
    %c0_i32 = arith.constant 0 : i32
    %c0_i32_0 = arith.constant 0 : i32
    %c0_i32_1 = arith.constant 0 : i32
    return %c0_i32, %c0_i32_0 : i32, i32
  }
  func.func @transform_1(%arg0: i32) -> (i32, i32) {
    %c0_i32 = arith.constant 0 : i32
    %c0_i32_0 = arith.constant 0 : i32
    %c0_i32_1 = arith.constant 0 : i32
    return %c0_i32, %c0_i32_0 : i32, i32
  }
  func.func @transform_2(%arg0: i32) -> (i32, i32) {
    %c0_i32 = arith.constant 0 : i32
    %c0_i32_0 = arith.constant 0 : i32
    %c0_i32_1 = arith.constant 0 : i32
    return %c0_i32, %c0_i32_0 : i32, i32
  }
  func.func @transform_3(%arg0: i32) -> (i32, i32) {
    %c0_i32 = arith.constant 0 : i32
    %c0_i32_0 = arith.constant 0 : i32
    %c0_i32_1 = arith.constant 0 : i32
    return %c0_i32, %c0_i32_0 : i32, i32
  }
  func.func @transform_4(%arg0: i32) -> (i32, i32) {
    %c0_i32 = arith.constant 0 : i32
    %c0_i32_0 = arith.constant 0 : i32
    %c0_i32_1 = arith.constant 0 : i32
    return %c0_i32, %c0_i32_0 : i32, i32
  }
  func.func @transform_5(%arg0: i32) -> (i32, i32) {
    %c0_i32 = arith.constant 0 : i32
    %c0_i32_0 = arith.constant 0 : i32
    %c0_i32_1 = arith.constant 0 : i32
    return %c0_i32, %c0_i32_0 : i32, i32
  }
  func.func @transform_6(%arg0: i32) -> (i32, i32) {
    %c0_i32 = arith.constant 0 : i32
    %c0_i32_0 = arith.constant 0 : i32
    %c0_i32_1 = arith.constant 0 : i32
    return %c0_i32, %c0_i32_0 : i32, i32
  }
  func.func @transform_7(%arg0: i32) -> (i32, i32) {
    %c0_i32 = arith.constant 0 : i32
    %c0_i32_0 = arith.constant 0 : i32
    %c0_i32_1 = arith.constant 0 : i32
    return %c0_i32, %c0_i32_0 : i32, i32
  }
}

</mosaic_0001>

<llo_original>
// kernel: generator_forward.1
$region0: #{generator_forward.1}
  #allocation0 [shape = 'u32[]', space=smem, size = 0x4, offset = 0x4, fixed_abs, tag = 'smem constant byte address 0x4 - core index']
  #allocation1 [shape = 'u32[144,128]{1,0:T(1,128)}', space=vmem, size = 0x12000, scoped, tag = 'internal scratch']
  %s0 = inlined_call_operand.vmem [shape: f32[8,42], index: 0, kind: input, shape index: {}]
  %s1 = inlined_call_operand.vmem [shape: bf16[42,256], index: 1, kind: input, shape index: {}]
  %s2 = inlined_call_operand.vmem [shape: f32[3,256], index: 2, kind: input, shape index: {}]
  %s3 = inlined_call_operand.hbm [shape: bf16[256,512], index: 3, kind: input, shape index: {}]
  %s4 = inlined_call_operand.vmem [shape: f32[3,512], index: 4, kind: input, shape index: {}]
  %s5 = inlined_call_operand.vmem [shape: bf16[512,16], index: 5, kind: input, shape index: {}]
  %s6 = inlined_call_operand.vmem [shape: f32[1,16], index: 6, kind: input, shape index: {}]
  %s7 = inlined_call_operand.hbm [shape: f32[8,16], index: 7, kind: output, shape index: {}]
  %s8 = sld [smem:[#allocation0]]
  $region42: #{generator_forward.1} parent=0
    _
  %s10 = ssub.s32 1, %s8
  %s11 = scalar_select 0, %s10, %s8
  $region1: #{generator_forward.1} parent=0
    #allocation2 [shape = 'u8[262144]{0}', space=vmem, size = 0x40000, scoped, tag = 'input window, operand 3, single buffered']
    #allocation3 [shape = 's32[1]{0}', space=sflag, size = 0x4, scoped, tag = 'scoped memory for generator_forward.1']
    #allocation4 [shape = 's32[1]{0}', space=sflag, size = 0x4, scoped, tag = 'scoped memory for generator_forward.1']
    #allocation5 [shape = 'u8[4096]{0}', space=vmem, size = 0x1000, scoped, tag = 'output window, operand 0, single buffered']
    %12 = vsyncpa [#allocation3], 0
    %13 = vsyncpa [#allocation4], 0
    // Predicated region
    $region2: #{generator_forward.1} parent=1 // pred_check
      _
    $region3: #{generator_forward.1} parent=1 // pred_check_branch
      %15 = sbr.rel (0) target = $region5
    $region4: #{generator_forward.1} parent=1 // pred_region
      _
    $region5: #{generator_forward.1} parent=1 // pred_fallthru
      _
    // Predicated region
    $region6: #{generator_forward.1} parent=1 // pred_check
      _
    $region7: #{generator_forward.1} parent=1 // pred_check_branch
      %17 = sbr.rel (0) target = $region9
    $region8: #{generator_forward.1} parent=1 // pred_region
      _
    $region9: #{generator_forward.1} parent=1 // pred_fallthru
      _
    // Predicated region
    $region10: #{generator_forward.1} parent=1 // pred_check
      _
    $region11: #{generator_forward.1} parent=1 // pred_check_branch
      %19 = sbr.rel (0) target = $region13
    $region12: #{generator_forward.1} parent=1 // pred_region
      _
    $region13: #{generator_forward.1} parent=1 // pred_fallthru
      _
    // Predicated region
    $region14: #{generator_forward.1} parent=1 // pred_check
      _
    $region15: #{generator_forward.1} parent=1 // pred_check_branch
      %21 = sbr.rel (0) target = $region17
    $region16: #{generator_forward.1} parent=1 // pred_region
      %s23 = ssub.s32 8192, 8192
      %24 = vsyncadd [#allocation3], %s23
      %s25 = sshll.u32 [#allocation2], 4
      %s26 = int_to_ptr.vmem [resolvable:$true] %s25
      %31 = dma.hbm_to_vmem [thread:$0]  %s3, 8192, %s26, [#allocation3], 256, 256, 16
    $region17: #{generator_forward.1} parent=1 // pred_fallthru
      _
    // Predicated region
    $region18: #{generator_forward.1} parent=1 // pred_check
      _
    $region19: #{generator_forward.1} parent=1 // pred_check_branch
      %33 = sbr.rel (0) target = $region21
    $region20: #{generator_forward.1} parent=1 // pred_region
      _
    $region21: #{generator_forward.1} parent=1 // pred_fallthru
      _
    // Predicated region
    $region22: #{generator_forward.1} parent=1 // pred_check
      _
    $region23: #{generator_forward.1} parent=1 // pred_check_branch
      %35 = sbr.rel (0) target = $region25
    $region24: #{generator_forward.1} parent=1 // pred_region
      _
    $region25: #{generator_forward.1} parent=1 // pred_fallthru
      _
    // Predicated region
    $region26: #{generator_forward.1} parent=1 // pred_check
      _
    $region27: #{generator_forward.1} parent=1 // pred_check_branch
      %37 = sbr.rel (0) target = $region29
    $region28: #{generator_forward.1} parent=1 // pred_region
      _
    $region29: #{generator_forward.1} parent=1 // pred_fallthru
      _
    // Predicated region
    $region30: #{generator_forward.1} parent=1 // pred_check
      _
    $region31: #{generator_forward.1} parent=1 // pred_check_branch
      %39 = sbr.rel (0) target = $region33
    $region32: #{generator_forward.1} parent=1 // pred_region
      %40 = dma.done [#allocation3], 8192
    $region33: #{generator_forward.1} parent=1 // pred_fallthru
      _
    %v42 = vld [vmem:[%s0] sm:$0xff]
    %v43 = vpack.c.bf16 %v42, %v42
    %v44 = vld [vmem:[%s1] sm:$0xff]
    %v45 = vld [vmem:[%s1 + $0x8] sm:$0xff]
    %v46 = vld [vmem:[%s1 + $0x10] sm:$0xff]
    %v47 = vld [vmem:[%s1 + $0x18] sm:$0xff]
    %v48 = vld [vmem:[%s1 + $0x20] sm:$0xff]
    %v49 = vld [vmem:[%s1 + $0x28] sm:$0x11]
    %v50 = vld [vmem:[%s2] ss:$4 sm:$0x3]
    %v52 = vlaneseq
    %v53 = vshrl.u32 %v52, 7
    %v54 = vsub.s32 0, %v53
    %v55 = vrot.slane %v50, %v54
    %v56 = vlaneseq
    %v57 = vshrl.u32 %v56, 7
    %v58 = vsub.s32 1, %v57
    %v59 = vrot.slane %v50, %v58
    %v68 = vunpack.c.l.b16 %v44
    %v69 = vunpack.c.h.b16 %v44
    %v70 = vunpack.c.l.b16 %v45
    %v71 = vunpack.c.h.b16 %v45
    %v72 = vunpack.c.l.b16 %v46
    %v73 = vunpack.c.h.b16 %v46
    %v74 = vunpack.c.l.b16 %v47
    %v75 = vunpack.c.h.b16 %v47
    %v76 = vunpack.c.l.b16 %v48
    %v77 = vunpack.c.h.b16 %v48
    %v78 = vunpack.c.l.b16 %v49
    %v79 = vunpack.c.h.b16 %v49
    %v80 = vpack.c.b16 %v70, %v68
    %v81 = vpack.c.b16 %v71, %v69
    %v82 = vpack.c.b16 %v74, %v72
    %v83 = vpack.c.b16 %v75, %v73
    %v84 = vpack.c.b16 %v78, %v76
    %v85 = vpack.c.b16 %v79, %v77
    %vm90 = vcmask 343040
    %v92 = vsel %vm90, %v43, 0
    %vm94 = vcmask 1044480
    %v96 = vsel %vm94, %v84, 0
    %v99 = vsel %vm94, %v85, 0
    %101 = vmatprep.subr.bf16.mxu0 %v81
    %102 = vmatpush1.bf16.msra.mxu0 %v80
    %103 = vmatprep.subr.bf16.mxu0 %v83
    %104 = vmatpush1.bf16.msra.mxu0 %v82
    %105 = vmatprep.subr.bf16.mxu0 %v99
    %106 = vmatpush1.bf16.msra.mxu0 %v96
    %107 = vmatprep.subr.bf16.mxu0 0
    %108 = vmatpush1.bf16.msra.mxu0 0
    %109 = vmatprep.subr.bf16.mxu0 0
    %110 = vmatpush1.bf16.msra.mxu0 0
    %111 = vmatprep.subr.bf16.mxu0 0
    %112 = vmatpush1.bf16.msra.mxu0 0
    %113 = vmatprep.subr.bf16.mxu0 0
    %114 = vmatpush1.bf16.msra.mxu0 0
    %115 = vmatprep.subr.bf16.mxu0 0
    %116 = vmatpush1.bf16.msra.mxu0 0
    %117 = vmatprep.subr.bf16.mxu0 0
    %118 = vmatpush1.bf16.msra.mxu0 0
    %119 = vmatprep.subr.bf16.mxu0 0
    %120 = vmatpush1.bf16.msra.mxu0 0
    %121 = vmatprep.subr.bf16.mxu0 0
    %122 = vmatpush1.bf16.msra.mxu0 0
    %123 = vmatprep.subr.bf16.mxu0 0
    %124 = vmatpush1.bf16.msra.mxu0 0
    %125 = vmatprep.subr.bf16.mxu0 0
    %126 = vmatpush1.bf16.msra.mxu0 0
    %127 = vmatprep.subr.bf16.mxu0 0
    %128 = vmatpush1.bf16.msra.mxu0 0
    %129 = vmatprep.subr.bf16.mxu0 0
    %130 = vmatpush1.bf16.msra.mxu0 0
    %131 = vmatprep.subr.bf16.mxu0 0
    %132 = vmatpush1.bf16.msra.mxu0 0
    %133 = vmatprep.mubr.bf16.mxu0 0
    %134 = vmatmul.mubr.bf16.gmra.mrb[0].mxu0 %v92
    %v135 = vpop.f32.mrb[0].mxu0
    %v136 = vadd.f32 %v55, %v135
    %v137 = vpop.f32.mrb[0].mxu0
    %v138 = vadd.f32 %v59, %v137
    %v139 = vpop.f32.mrb[0].mxu0
    %v140 = vpop.f32.mrb[0].mxu0
    %141 = vdwg.mxu0
    %v142 = vmul.f32 %v136, 0.2
    %v143 = vmul.f32 %v138, 0.2
    %v144 = vmax.f32 %v136, %v142
    %v145 = vmax.f32 %v138, %v143
    %v146 = vrot.slane %v144, 4
    %v147 = vadd.f32 %v144, %v146
    %v148 = vrot.slane %v147, 2
    %v149 = vadd.f32 %v147, %v148
    %v150 = vrot.slane %v149, 1
    %v151 = vadd.f32 %v149, %v150
    %v152 = vrot.slane %v145, 4
    %v153 = vadd.f32 %v145, %v152
    %v154 = vrot.slane %v153, 2
    %v155 = vadd.f32 %v153, %v154
    %v156 = vrot.slane %v155, 1
    %v157 = vadd.f32 %v155, %v156
    %v158 = vrcp.pop 8.0
    %v159 = vmul.f32 %v151, %v158
    %v160 = vmul.f32 %v157, %v158
    %v161 = vsub.f32 %v144, %v159
    %v162 = vsub.f32 %v145, %v160
    %v163 = vmul.f32 %v161, %v161
    %v164 = vmul.f32 %v162, %v162
    %v165 = vrot.slane %v163, 4
    %v166 = vadd.f32 %v163, %v165
    %v167 = vrot.slane %v166, 2
    %v168 = vadd.f32 %v166, %v167
    %v169 = vrot.slane %v168, 1
    %v170 = vadd.f32 %v168, %v169
    %v171 = vrot.slane %v164, 4
    %v172 = vadd.f32 %v164, %v171
    %v173 = vrot.slane %v172, 2
    %v174 = vadd.f32 %v172, %v173
    %v175 = vrot.slane %v174, 1
    %v176 = vadd.f32 %v174, %v175
    %v177 = vmul.f32 %v170, %v158
    %v178 = vmul.f32 %v176, %v158
    %s179 = scalar_lea.vmem %s2, 1
    %v180 = vld [vmem:[%s179] ss:$4 sm:$0x3]
    %v181 = vadd.f32 %v177, 1e-05
    %v182 = vadd.f32 %v178, 1e-05
    %v183 = vrsqrt.pop %v181
    %v184 = vrsqrt.pop %v182
    %v187 = vcombine.low %v183, %v184
    %v189 = vunpack.c.l.s4 1966171168
    %v190 = vunpack.c.0.s8 %v189
    %v191 = vlaneseq
    %v192 = vshrl.u32 %v191, 7
    %v193 = vsub.s32 %v190, %v192
    %v194 = vrot.slane %v187, %v193
    %v196 = vunpack.c.l.s4 1966171168
    %v197 = vunpack.c.0.s8 %v196
    %v198 = vlaneseq
    %v199 = vshrl.u32 %v198, 7
    %v200 = vsub.s32 %v197, %v199
    %v201 = vrot.slane %v194, %v200
    %v203 = vmul.f32 %v180, %v201
    %v205 = vlaneseq
    %v206 = vshrl.u32 %v205, 7
    %v207 = vsub.s32 0, %v206
    %v208 = vrot.slane %v203, %v207
    %v209 = vlaneseq
    %v210 = vshrl.u32 %v209, 7
    %v211 = vsub.s32 1, %v210
    %v212 = vrot.slane %v203, %v211
    %v215 = vmul.f32 %v161, %v208
    %v216 = vmul.f32 %v162, %v212
    %s217 = scalar_lea.vmem %s2, 2
    %v218 = vld [vmem:[%s217] ss:$4 sm:$0x3]
    %v220 = vlaneseq
    %v221 = vshrl.u32 %v220, 7
    %v222 = vsub.s32 0, %v221
    %v223 = vrot.slane %v218, %v222
    %v224 = vlaneseq
    %v225 = vshrl.u32 %v224, 7
    %v226 = vsub.s32 1, %v225
    %v227 = vrot.slane %v218, %v226
    %v230 = vadd.f32 %v215, %v223
    %v231 = vadd.f32 %v216, %v227
    %v232 = vpack.c.bf16 %v230, %v230
    %v233 = vpack.c.bf16 %v231, %v231
    %v234 = vld [vmem:[#allocation2] sm:$0xff]
    %v235 = vld [vmem:[#allocation2 + $0x8] sm:$0xff]
    %v236 = vld [vmem:[#allocation2 + $0x10] sm:$0xff]
    %v237 = vld [vmem:[#allocation2 + $0x18] sm:$0xff]
    %v238 = vld [vmem:[#allocation2 + $0x20] sm:$0xff]
    %v239 = vld [vmem:[#allocation2 + $0x28] sm:$0xff]
    %v240 = vld [vmem:[#allocation2 + $0x30] sm:$0xff]
    %v241 = vld [vmem:[#allocation2 + $0x38] sm:$0xff]
    %v242 = vld [vmem:[#allocation2 + $0x40] sm:$0xff]
    %v243 = vld [vmem:[#allocation2 + $0x48] sm:$0xff]
    %v244 = vld [vmem:[#allocation2 + $0x50] sm:$0xff]
    %v245 = vld [vmem:[#allocation2 + $0x58] sm:$0xff]
    %v246 = vld [vmem:[#allocation2 + $0x60] sm:$0xff]
    %v247 = vld [vmem:[#allocation2 + $0x68] sm:$0xff]
    %v248 = vld [vmem:[#allocation2 + $0x70] sm:$0xff]
    %v249 = vld [vmem:[#allocation2 + $0x78] sm:$0xff]
    %v250 = vld [vmem:[#allocation2 + $0x80] sm:$0xff]
    %v251 = vld [vmem:[#allocation2 + $0x88] sm:$0xff]
    %v252 = vld [vmem:[#allocation2 + $0x90] sm:$0xff]
    %v253 = vld [vmem:[#allocation2 + $0x98] sm:$0xff]
    %v254 = vld [vmem:[#allocation2 + $0xa0] sm:$0xff]
    %v255 = vld [vmem:[#allocation2 + $0xa8] sm:$0xff]
    %v256 = vld [vmem:[#allocation2 + $0xb0] sm:$0xff]
    %v257 = vld [vmem:[#allocation2 + $0xb8] sm:$0xff]
    %v258 = vld [vmem:[#allocation2 + $0xc0] sm:$0xff]
    %v259 = vld [vmem:[#allocation2 + $0xc8] sm:$0xff]
    %v260 = vld [vmem:[#allocation2 + $0xd0] sm:$0xff]
    %v261 = vld [vmem:[#allocation2 + $0xd8] sm:$0xff]
    %v262 = vld [vmem:[#allocation2 + $0xe0] sm:$0xff]
    %v263 = vld [vmem:[#allocation2 + $0xe8] sm:$0xff]
    %v264 = vld [vmem:[#allocation2 + $0xf0] sm:$0xff]
    %v265 = vld [vmem:[#allocation2 + $0xf8] sm:$0xff]
    %v266 = vld [vmem:[#allocation2 + $0x100] sm:$0xff]
    %v267 = vld [vmem:[#allocation2 + $0x108] sm:$0xff]
    %v268 = vld [vmem:[#allocation2 + $0x110] sm:$0xff]
    %v269 = vld [vmem:[#allocation2 + $0x118] sm:$0xff]
    %v270 = vld [vmem:[#allocation2 + $0x120] sm:$0xff]
    %v271 = vld [vmem:[#allocation2 + $0x128] sm:$0xff]
    %v272 = vld [vmem:[#allocation2 + $0x130] sm:$0xff]
    %v273 = vld [vmem:[#allocation2 + $0x138] sm:$0xff]
    %v274 = vld [vmem:[#allocation2 + $0x140] sm:$0xff]
    %v275 = vld [vmem:[#allocation2 + $0x148] sm:$0xff]
    %v276 = vld [vmem:[#allocation2 + $0x150] sm:$0xff]
    %v277 = vld [vmem:[#allocation2 + $0x158] sm:$0xff]
    %v278 = vld [vmem:[#allocation2 + $0x160] sm:$0xff]
    %v279 = vld [vmem:[#allocation2 + $0x168] sm:$0xff]
    %v280 = vld [vmem:[#allocation2 + $0x170] sm:$0xff]
    %v281 = vld [vmem:[#allocation2 + $0x178] sm:$0xff]
    %v282 = vld [vmem:[#allocation2 + $0x180] sm:$0xff]
    %v283 = vld [vmem:[#allocation2 + $0x188] sm:$0xff]
    %v284 = vld [vmem:[#allocation2 + $0x190] sm:$0xff]
    %v285 = vld [vmem:[#allocation2 + $0x198] sm:$0xff]
    %v286 = vld [vmem:[#allocation2 + $0x1a0] sm:$0xff]
    %v287 = vld [vmem:[#allocation2 + $0x1a8] sm:$0xff]
    %v288 = vld [vmem:[#allocation2 + $0x1b0] sm:$0xff]
    %v289 = vld [vmem:[#allocation2 + $0x1b8] sm:$0xff]
    %v290 = vld [vmem:[#allocation2 + $0x1c0] sm:$0xff]
    %v291 = vld [vmem:[#allocation2 + $0x1c8] sm:$0xff]
    %v292 = vld [vmem:[#allocation2 + $0x1d0] sm:$0xff]
    %v293 = vld [vmem:[#allocation2 + $0x1d8] sm:$0xff]
    %v294 = vld [vmem:[#allocation2 + $0x1e0] sm:$0xff]
    %v295 = vld [vmem:[#allocation2 + $0x1e8] sm:$0xff]
    %v296 = vld [vmem:[#allocation2 + $0x1f0] sm:$0xff]
    %v297 = vld [vmem:[#allocation2 + $0x1f8] sm:$0xff]
    %v298 = vld [vmem:[%s4] ss:$4 sm:$0xf]
    %v300 = vlaneseq
    %v301 = vshrl.u32 %v300, 7
    %v302 = vsub.s32 0, %v301
    %v303 = vrot.slane %v298, %v302
    %v304 = vlaneseq
    %v305 = vshrl.u32 %v304, 7
    %v306 = vsub.s32 1, %v305
    %v307 = vrot.slane %v298, %v306
    %v308 = vlaneseq
    %v309 = vshrl.u32 %v308, 7
    %v310 = vsub.s32 2, %v309
    %v311 = vrot.slane %v298, %v310
    %v312 = vlaneseq
    %v313 = vshrl.u32 %v312, 7
    %v314 = vsub.s32 3, %v313
    %v315 = vrot.slane %v298, %v314
    %v384 = vunpack.c.l.b16 %v234
    %v385 = vunpack.c.h.b16 %v234
    %v386 = vunpack.c.l.b16 %v235
    %v387 = vunpack.c.h.b16 %v235
    %v388 = vunpack.c.l.b16 %v236
    %v389 = vunpack.c.h.b16 %v236
    %v390 = vunpack.c.l.b16 %v237
    %v391 = vunpack.c.h.b16 %v237
    %v392 = vunpack.c.l.b16 %v238
    %v393 = vunpack.c.h.b16 %v238
    %v394 = vunpack.c.l.b16 %v239
    %v395 = vunpack.c.h.b16 %v239
    %v396 = vunpack.c.l.b16 %v240
    %v397 = vunpack.c.h.b16 %v240
    %v398 = vunpack.c.l.b16 %v241
    %v399 = vunpack.c.h.b16 %v241
    %v400 = vunpack.c.l.b16 %v242
    %v401 = vunpack.c.h.b16 %v242
    %v402 = vunpack.c.l.b16 %v243
    %v403 = vunpack.c.h.b16 %v243
    %v404 = vunpack.c.l.b16 %v244
    %v405 = vunpack.c.h.b16 %v244
    %v406 = vunpack.c.l.b16 %v245
    %v407 = vunpack.c.h.b16 %v245
    %v408 = vunpack.c.l.b16 %v246
    %v409 = vunpack.c.h.b16 %v246
    %v410 = vunpack.c.l.b16 %v247
    %v411 = vunpack.c.h.b16 %v247
    %v412 = vunpack.c.l.b16 %v248
    %v413 = vunpack.c.h.b16 %v248
    %v414 = vunpack.c.l.b16 %v249
    %v415 = vunpack.c.h.b16 %v249
    %v416 = vunpack.c.l.b16 %v250
    %v417 = vunpack.c.h.b16 %v250
    %v418 = vunpack.c.l.b16 %v251
    %v419 = vunpack.c.h.b16 %v251
    %v420 = vunpack.c.l.b16 %v252
    %v421 = vunpack.c.h.b16 %v252
    %v422 = vunpack.c.l.b16 %v253
    %v423 = vunpack.c.h.b16 %v253
    %v424 = vunpack.c.l.b16 %v254
    %v425 = vunpack.c.h.b16 %v254
    %v426 = vunpack.c.l.b16 %v255
    %v427 = vunpack.c.h.b16 %v255
    %v428 = vunpack.c.l.b16 %v256
    %v429 = vunpack.c.h.b16 %v256
    %v430 = vunpack.c.l.b16 %v257
    %v431 = vunpack.c.h.b16 %v257
    %v432 = vunpack.c.l.b16 %v258
    %v433 = vunpack.c.h.b16 %v258
    %v434 = vunpack.c.l.b16 %v259
    %v435 = vunpack.c.h.b16 %v259
    %v436 = vunpack.c.l.b16 %v260
    %v437 = vunpack.c.h.b16 %v260
    %v438 = vunpack.c.l.b16 %v261
    %v439 = vunpack.c.h.b16 %v261
    %v440 = vunpack.c.l.b16 %v262
    %v441 = vunpack.c.h.b16 %v262
    %v442 = vunpack.c.l.b16 %v263
    %v443 = vunpack.c.h.b16 %v263
    %v444 = vunpack.c.l.b16 %v264
    %v445 = vunpack.c.h.b16 %v264
    %v446 = vunpack.c.l.b16 %v265
    %v447 = vunpack.c.h.b16 %v265
    %v448 = vunpack.c.l.b16 %v266
    %v449 = vunpack.c.h.b16 %v266
    %v450 = vunpack.c.l.b16 %v267
    %v451 = vunpack.c.h.b16 %v267
    %v452 = vunpack.c.l.b16 %v268
    %v453 = vunpack.c.h.b16 %v268
    %v454 = vunpack.c.l.b16 %v269
    %v455 = vunpack.c.h.b16 %v269
    %v456 = vunpack.c.l.b16 %v270
    %v457 = vunpack.c.h.b16 %v270
    %v458 = vunpack.c.l.b16 %v271
    %v459 = vunpack.c.h.b16 %v271
    %v460 = vunpack.c.l.b16 %v272
    %v461 = vunpack.c.h.b16 %v272
    %v462 = vunpack.c.l.b16 %v273
    %v463 = vunpack.c.h.b16 %v273
    %v464 = vunpack.c.l.b16 %v274
    %v465 = vunpack.c.h.b16 %v274
    %v466 = vunpack.c.l.b16 %v275
    %v467 = vunpack.c.h.b16 %v275
    %v468 = vunpack.c.l.b16 %v276
    %v469 = vunpack.c.h.b16 %v276
    %v470 = vunpack.c.l.b16 %v277
    %v471 = vunpack.c.h.b16 %v277
    %v472 = vunpack.c.l.b16 %v278
    %v473 = vunpack.c.h.b16 %v278
    %v474 = vunpack.c.l.b16 %v279
    %v475 = vunpack.c.h.b16 %v279
    %v476 = vunpack.c.l.b16 %v280
    %v477 = vunpack.c.h.b16 %v280
    %v478 = vunpack.c.l.b16 %v281
    %v479 = vunpack.c.h.b16 %v281
    %v480 = vunpack.c.l.b16 %v282
    %v481 = vunpack.c.h.b16 %v282
    %v482 = vunpack.c.l.b16 %v283
    %v483 = vunpack.c.h.b16 %v283
    %v484 = vunpack.c.l.b16 %v284
    %v485 = vunpack.c.h.b16 %v284
    %v486 = vunpack.c.l.b16 %v285
    %v487 = vunpack.c.h.b16 %v285
    %v488 = vunpack.c.l.b16 %v286
    %v489 = vunpack.c.h.b16 %v286
    %v490 = vunpack.c.l.b16 %v287
    %v491 = vunpack.c.h.b16 %v287
    %v492 = vunpack.c.l.b16 %v288
    %v493 = vunpack.c.h.b16 %v288
    %v494 = vunpack.c.l.b16 %v289
    %v495 = vunpack.c.h.b16 %v289
    %v496 = vunpack.c.l.b16 %v290
    %v497 = vunpack.c.h.b16 %v290
    %v498 = vunpack.c.l.b16 %v291
    %v499 = vunpack.c.h.b16 %v291
    %v500 = vunpack.c.l.b16 %v292
    %v501 = vunpack.c.h.b16 %v292
    %v502 = vunpack.c.l.b16 %v293
    %v503 = vunpack.c.h.b16 %v293
    %v504 = vunpack.c.l.b16 %v294
    %v505 = vunpack.c.h.b16 %v294
    %v506 = vunpack.c.l.b16 %v295
    %v507 = vunpack.c.h.b16 %v295
    %v508 = vunpack.c.l.b16 %v296
    %v509 = vunpack.c.h.b16 %v296
    %v510 = vunpack.c.l.b16 %v297
    %v511 = vunpack.c.h.b16 %v297
    %v512 = vpack.c.b16 %v388, %v384
    %v513 = vpack.c.b16 %v389, %v385
    %v514 = vpack.c.b16 %v390, %v386
    %v515 = vpack.c.b16 %v391, %v387
    %v516 = vpack.c.b16 %v396, %v392
    %v517 = vpack.c.b16 %v397, %v393
    %v518 = vpack.c.b16 %v398, %v394
    %v519 = vpack.c.b16 %v399, %v395
    %v520 = vpack.c.b16 %v404, %v400
    %v521 = vpack.c.b16 %v405, %v401
    %v522 = vpack.c.b16 %v406, %v402
    %v523 = vpack.c.b16 %v407, %v403
    %v524 = vpack.c.b16 %v412, %v408
    %v525 = vpack.c.b16 %v413, %v409
    %v526 = vpack.c.b16 %v414, %v410
    %v527 = vpack.c.b16 %v415, %v411
    %v528 = vpack.c.b16 %v420, %v416
    %v529 = vpack.c.b16 %v421, %v417
    %v530 = vpack.c.b16 %v422, %v418
    %v531 = vpack.c.b16 %v423, %v419
    %v532 = vpack.c.b16 %v428, %v424
    %v533 = vpack.c.b16 %v429, %v425
    %v534 = vpack.c.b16 %v430, %v426
    %v535 = vpack.c.b16 %v431, %v427
    %v536 = vpack.c.b16 %v436, %v432
    %v537 = vpack.c.b16 %v437, %v433
    %v538 = vpack.c.b16 %v438, %v434
    %v539 = vpack.c.b16 %v439, %v435
    %v540 = vpack.c.b16 %v444, %v440
    %v541 = vpack.c.b16 %v445, %v441
    %v542 = vpack.c.b16 %v446, %v442
    %v543 = vpack.c.b16 %v447, %v443
    %v544 = vpack.c.b16 %v452, %v448
    %v545 = vpack.c.b16 %v453, %v449
    %v546 = vpack.c.b16 %v454, %v450
    %v547 = vpack.c.b16 %v455, %v451
    %v548 = vpack.c.b16 %v460, %v456
    %v549 = vpack.c.b16 %v461, %v457
    %v550 = vpack.c.b16 %v462, %v458
    %v551 = vpack.c.b16 %v463, %v459
    %v552 = vpack.c.b16 %v468, %v464
    %v553 = vpack.c.b16 %v469, %v465
    %v554 = vpack.c.b16 %v470, %v466
    %v555 = vpack.c.b16 %v471, %v467
    %v556 = vpack.c.b16 %v476, %v472
    %v557 = vpack.c.b16 %v477, %v473
    %v558 = vpack.c.b16 %v478, %v474
    %v559 = vpack.c.b16 %v479, %v475
    %v560 = vpack.c.b16 %v484, %v480
    %v561 = vpack.c.b16 %v485, %v481
    %v562 = vpack.c.b16 %v486, %v482
    %v563 = vpack.c.b16 %v487, %v483
    %v564 = vpack.c.b16 %v492, %v488
    %v565 = vpack.c.b16 %v493, %v489
    %v566 = vpack.c.b16 %v494, %v490
    %v567 = vpack.c.b16 %v495, %v491
    %v568 = vpack.c.b16 %v500, %v496
    %v569 = vpack.c.b16 %v501, %v497
    %v570 = vpack.c.b16 %v502, %v498
    %v571 = vpack.c.b16 %v503, %v499
    %v572 = vpack.c.b16 %v508, %v504
    %v573 = vpack.c.b16 %v509, %v505
    %v574 = vpack.c.b16 %v510, %v506
    %v575 = vpack.c.b16 %v511, %v507
    %640 = vmatprep.subr.bf16.mxu0 %v513
    %641 = vmatpush1.bf16.msra.mxu0 %v512
    %642 = vmatprep.subr.bf16.mxu0 %v517
    %643 = vmatpush1.bf16.msra.mxu0 %v516
    %644 = vmatprep.subr.bf16.mxu0 %v521
    %645 = vmatpush1.bf16.msra.mxu0 %v520
    %646 = vmatprep.subr.bf16.mxu0 %v525
    %647 = vmatpush1.bf16.msra.mxu0 %v524
    %648 = vmatprep.subr.bf16.mxu0 %v529
    %649 = vmatpush1.bf16.msra.mxu0 %v528
    %650 = vmatprep.subr.bf16.mxu0 %v533
    %651 = vmatpush1.bf16.msra.mxu0 %v532
    %652 = vmatprep.subr.bf16.mxu0 %v537
    %653 = vmatpush1.bf16.msra.mxu0 %v536
    %654 = vmatprep.subr.bf16.mxu0 %v541
    %655 = vmatpush1.bf16.msra.mxu0 %v540
    %656 = vmatprep.subr.bf16.mxu0 %v545
    %657 = vmatpush1.bf16.msra.mxu0 %v544
    %658 = vmatprep.subr.bf16.mxu0 %v549
    %659 = vmatpush1.bf16.msra.mxu0 %v548
    %660 = vmatprep.subr.bf16.mxu0 %v553
    %661 = vmatpush1.bf16.msra.mxu0 %v552
    %662 = vmatprep.subr.bf16.mxu0 %v557
    %663 = vmatpush1.bf16.msra.mxu0 %v556
    %664 = vmatprep.subr.bf16.mxu0 %v561
    %665 = vmatpush1.bf16.msra.mxu0 %v560
    %666 = vmatprep.subr.bf16.mxu0 %v565
    %667 = vmatpush1.bf16.msra.mxu0 %v564
    %668 = vmatprep.subr.bf16.mxu0 %v569
    %669 = vmatpush1.bf16.msra.mxu0 %v568
    %670 = vmatprep.subr.bf16.mxu0 %v573
    %671 = vmatpush1.bf16.msra.mxu0 %v572
    %672 = vmatprep.mubr.bf16.mxu0 %v233
    %673 = vmatmul.mubr.bf16.gmra.mrb[0].mxu0 %v232
    %v674 = vpop.f32.mrb[0].mxu0
    %v675 = vadd.f32 %v303, %v674
    %v676 = vpop.f32.mrb[0].mxu0
    %v677 = vadd.f32 %v307, %v676
    %v678 = vpop.f32.mrb[0].mxu0
    %v679 = vpop.f32.mrb[0].mxu0
    %680 = vdwg.mxu0
    %681 = vmatprep.subr.bf16.mxu0 %v515
    %682 = vmatpush1.bf16.msra.mxu0 %v514
    %683 = vmatprep.subr.bf16.mxu0 %v519
    %684 = vmatpush1.bf16.msra.mxu0 %v518
    %685 = vmatprep.subr.bf16.mxu0 %v523
    %686 = vmatpush1.bf16.msra.mxu0 %v522
    %687 = vmatprep.subr.bf16.mxu0 %v527
    %688 = vmatpush1.bf16.msra.mxu0 %v526
    %689 = vmatprep.subr.bf16.mxu0 %v531
    %690 = vmatpush1.bf16.msra.mxu0 %v530
    %691 = vmatprep.subr.bf16.mxu0 %v535
    %692 = vmatpush1.bf16.msra.mxu0 %v534
    %693 = vmatprep.subr.bf16.mxu0 %v539
    %694 = vmatpush1.bf16.msra.mxu0 %v538
    %695 = vmatprep.subr.bf16.mxu0 %v543
    %696 = vmatpush1.bf16.msra.mxu0 %v542
    %697 = vmatprep.subr.bf16.mxu0 %v547
    %698 = vmatpush1.bf16.msra.mxu0 %v546
    %699 = vmatprep.subr.bf16.mxu0 %v551
    %700 = vmatpush1.bf16.msra.mxu0 %v550
    %701 = vmatprep.subr.bf16.mxu0 %v555
    %702 = vmatpush1.bf16.msra.mxu0 %v554
    %703 = vmatprep.subr.bf16.mxu0 %v559
    %704 = vmatpush1.bf16.msra.mxu0 %v558
    %705 = vmatprep.subr.bf16.mxu0 %v563
    %706 = vmatpush1.bf16.msra.mxu0 %v562
    %707 = vmatprep.subr.bf16.mxu0 %v567
    %708 = vmatpush1.bf16.msra.mxu0 %v566
    %709 = vmatprep.subr.bf16.mxu0 %v571
    %710 = vmatpush1.bf16.msra.mxu0 %v570
    %711 = vmatprep.subr.bf16.mxu0 %v575
    %712 = vmatpush1.bf16.msra.mxu0 %v574
    %713 = vmatprep.mubr.bf16.mxu0 %v233
    %714 = vmatmul.mubr.bf16.gmra.mrb[0].mxu0 %v232
    %v715 = vpop.f32.mrb[0].mxu0
    %v716 = vadd.f32 %v311, %v715
    %v717 = vpop.f32.mrb[0].mxu0
    %v718 = vadd.f32 %v315, %v717
    %v719 = vpop.f32.mrb[0].mxu0
    %v720 = vpop.f32.mrb[0].mxu0
    %721 = vdwg.mxu0
    %v722 = vmul.f32 %v675, 0.2
    %v723 = vmul.f32 %v677, 0.2
    %v724 = vmul.f32 %v716, 0.2
    %v725 = vmul.f32 %v718, 0.2
    %v726 = vmax.f32 %v675, %v722
    %v727 = vmax.f32 %v677, %v723
    %v728 = vmax.f32 %v716, %v724
    %v729 = vmax.f32 %v718, %v725
    %v730 = vrot.slane %v726, 4
    %v731 = vadd.f32 %v726, %v730
    %v732 = vrot.slane %v731, 2
    %v733 = vadd.f32 %v731, %v732
    %v734 = vrot.slane %v733, 1
    %v735 = vadd.f32 %v733, %v734
    %v736 = vrot.slane %v727, 4
    %v737 = vadd.f32 %v727, %v736
    %v738 = vrot.slane %v737, 2
    %v739 = vadd.f32 %v737, %v738
    %v740 = vrot.slane %v739, 1
    %v741 = vadd.f32 %v739, %v740
    %v742 = vrot.slane %v728, 4
    %v743 = vadd.f32 %v728, %v742
    %v744 = vrot.slane %v743, 2
    %v745 = vadd.f32 %v743, %v744
    %v746 = vrot.slane %v745, 1
    %v747 = vadd.f32 %v745, %v746
    %v748 = vrot.slane %v729, 4
    %v749 = vadd.f32 %v729, %v748
    %v750 = vrot.slane %v749, 2
    %v751 = vadd.f32 %v749, %v750
    %v752 = vrot.slane %v751, 1
    %v753 = vadd.f32 %v751, %v752
    %v754 = vmul.f32 %v735, %v158
    %v755 = vmul.f32 %v741, %v158
    %v756 = vmul.f32 %v747, %v158
    %v757 = vmul.f32 %v753, %v158
    %v758 = vsub.f32 %v726, %v754
    %v759 = vsub.f32 %v727, %v755
    %v760 = vsub.f32 %v728, %v756
    %v761 = vsub.f32 %v729, %v757
    %v762 = vmul.f32 %v758, %v758
    %v763 = vmul.f32 %v759, %v759
    %v764 = vmul.f32 %v760, %v760
    %v765 = vmul.f32 %v761, %v761
    %v766 = vrot.slane %v762, 4
    %v767 = vadd.f32 %v762, %v766
    %v768 = vrot.slane %v767, 2
    %v769 = vadd.f32 %v767, %v768
    %v770 = vrot.slane %v769, 1
    %v771 = vadd.f32 %v769, %v770
    %v772 = vrot.slane %v763, 4
    %v773 = vadd.f32 %v763, %v772
    %v774 = vrot.slane %v773, 2
    %v775 = vadd.f32 %v773, %v774
    %v776 = vrot.slane %v775, 1
    %v777 = vadd.f32 %v775, %v776
    %v778 = vrot.slane %v764, 4
    %v779 = vadd.f32 %v764, %v778
    %v780 = vrot.slane %v779, 2
    %v781 = vadd.f32 %v779, %v780
    %v782 = vrot.slane %v781, 1
    %v783 = vadd.f32 %v781, %v782
    %v784 = vrot.slane %v765, 4
    %v785 = vadd.f32 %v765, %v784
    %v786 = vrot.slane %v785, 2
    %v787 = vadd.f32 %v785, %v786
    %v788 = vrot.slane %v787, 1
    %v789 = vadd.f32 %v787, %v788
    %v790 = vmul.f32 %v771, %v158
    %v791 = vmul.f32 %v777, %v158
    %v792 = vmul.f32 %v783, %v158
    %v793 = vmul.f32 %v789, %v158
    %s794 = scalar_lea.vmem %s4, 1
    %v795 = vld [vmem:[%s794] ss:$4 sm:$0xf]
    %v796 = vadd.f32 %v790, 1e-05
    %v797 = vadd.f32 %v791, 1e-05
    %v798 = vadd.f32 %v792, 1e-05
    %v799 = vadd.f32 %v793, 1e-05
    %v800 = vrsqrt.pop %v796
    %v801 = vrsqrt.pop %v797
    %v802 = vrsqrt.pop %v798
    %v803 = vrsqrt.pop %v799
    %v808 = vcombine.low %v800, %v801
    %v809 = vcombine.low %v802, %v803
    %v811 = vunpack.c.l.s4 1966171168
    %v812 = vunpack.c.0.s8 %v811
    %v813 = vlaneseq
    %v814 = vshrl.u32 %v813, 7
    %v815 = vsub.s32 %v812, %v814
    %v816 = vrot.slane %v808, %v815
    %v818 = vunpack.c.l.s4 1966171168
    %v819 = vunpack.c.0.s8 %v818
    %v820 = vlaneseq
    %v821 = vshrl.u32 %v820, 7
    %v822 = vsub.s32 %v819, %v821
    %v823 = vrot.slane %v809, %v822
    %v824 = vcombine.low %v816, %v823
    %v826 = vunpack.c.l.s4 1966171168
    %v827 = vunpack.c.0.s8 %v826
    %v828 = vlaneseq
    %v829 = vshrl.u32 %v828, 7
    %v830 = vsub.s32 %v827, %v829
    %v831 = vrot.slane %v824, %v830
    %v833 = vmul.f32 %v795, %v831
    %v835 = vlaneseq
    %v836 = vshrl.u32 %v835, 7
    %v837 = vsub.s32 0, %v836
    %v838 = vrot.slane %v833, %v837
    %v839 = vlaneseq
    %v840 = vshrl.u32 %v839, 7
    %v841 = vsub.s32 1, %v840
    %v842 = vrot.slane %v833, %v841
    %v843 = vlaneseq
    %v844 = vshrl.u32 %v843, 7
    %v845 = vsub.s32 2, %v844
    %v846 = vrot.slane %v833, %v845
    %v847 = vlaneseq
    %v848 = vshrl.u32 %v847, 7
    %v849 = vsub.s32 3, %v848
    %v850 = vrot.slane %v833, %v849
    %v855 = vmul.f32 %v758, %v838
    %v856 = vmul.f32 %v759, %v842
    %v857 = vmul.f32 %v760, %v846
    %v858 = vmul.f32 %v761, %v850
    %s859 = scalar_lea.vmem %s4, 2
    %v860 = vld [vmem:[%s859] ss:$4 sm:$0xf]
    %v862 = vlaneseq
    %v863 = vshrl.u32 %v862, 7
    %v864 = vsub.s32 0, %v863
    %v865 = vrot.slane %v860, %v864
    %v866 = vlaneseq
    %v867 = vshrl.u32 %v866, 7
    %v868 = vsub.s32 1, %v867
    %v869 = vrot.slane %v860, %v868
    %v870 = vlaneseq
    %v871 = vshrl.u32 %v870, 7
    %v872 = vsub.s32 2, %v871
    %v873 = vrot.slane %v860, %v872
    %v874 = vlaneseq
    %v875 = vshrl.u32 %v874, 7
    %v876 = vsub.s32 3, %v875
    %v877 = vrot.slane %v860, %v876
    %v882 = vadd.f32 %v855, %v865
    %v883 = vadd.f32 %v856, %v869
    %v884 = vadd.f32 %v857, %v873
    %v885 = vadd.f32 %v858, %v877
    %v886 = vpack.c.bf16 %v882, %v882
    %v887 = vpack.c.bf16 %v883, %v883
    %v888 = vpack.c.bf16 %v884, %v884
    %v889 = vpack.c.bf16 %v885, %v885
    %v890 = vld [vmem:[%s5] sm:$0xf]
    %v891 = vld [vmem:[%s5 + $0x4] sm:$0xf]
    %v892 = vld [vmem:[%s5 + $0x8] sm:$0xf]
    %v893 = vld [vmem:[%s5 + $0xc] sm:$0xf]
    %v894 = vld [vmem:[%s5 + $0x10] sm:$0xf]
    %v895 = vld [vmem:[%s5 + $0x14] sm:$0xf]
    %v896 = vld [vmem:[%s5 + $0x18] sm:$0xf]
    %v897 = vld [vmem:[%s5 + $0x1c] sm:$0xf]
    %v898 = vld [vmem:[%s5 + $0x20] sm:$0xf]
    %v899 = vld [vmem:[%s5 + $0x24] sm:$0xf]
    %v900 = vld [vmem:[%s5 + $0x28] sm:$0xf]
    %v901 = vld [vmem:[%s5 + $0x2c] sm:$0xf]
    %v902 = vld [vmem:[%s5 + $0x30] sm:$0xf]
    %v903 = vld [vmem:[%s5 + $0x34] sm:$0xf]
    %v904 = vld [vmem:[%s5 + $0x38] sm:$0xf]
    %v905 = vld [vmem:[%s5 + $0x3c] sm:$0xf]
    %v906 = vld [vmem:[%s5 + $0x40] sm:$0xf]
    %v907 = vld [vmem:[%s5 + $0x44] sm:$0xf]
    %v908 = vld [vmem:[%s5 + $0x48] sm:$0xf]
    %v909 = vld [vmem:[%s5 + $0x4c] sm:$0xf]
    %v910 = vld [vmem:[%s5 + $0x50] sm:$0xf]
    %v911 = vld [vmem:[%s5 + $0x54] sm:$0xf]
    %v912 = vld [vmem:[%s5 + $0x58] sm:$0xf]
    %v913 = vld [vmem:[%s5 + $0x5c] sm:$0xf]
    %v914 = vld [vmem:[%s5 + $0x60] sm:$0xf]
    %v915 = vld [vmem:[%s5 + $0x64] sm:$0xf]
    %v916 = vld [vmem:[%s5 + $0x68] sm:$0xf]
    %v917 = vld [vmem:[%s5 + $0x6c] sm:$0xf]
    %v918 = vld [vmem:[%s5 + $0x70] sm:$0xf]
    %v919 = vld [vmem:[%s5 + $0x74] sm:$0xf]
    %v920 = vld [vmem:[%s5 + $0x78] sm:$0xf]
    %v921 = vld [vmem:[%s5 + $0x7c] sm:$0xf]
    %v922 = vld [vmem:[%s5 + $0x80] sm:$0xf]
    %v923 = vld [vmem:[%s5 + $0x84] sm:$0xf]
    %v924 = vld [vmem:[%s5 + $0x88] sm:$0xf]
    %v925 = vld [vmem:[%s5 + $0x8c] sm:$0xf]
    %v926 = vld [vmem:[%s5 + $0x90] sm:$0xf]
    %v927 = vld [vmem:[%s5 + $0x94] sm:$0xf]
    %v928 = vld [vmem:[%s5 + $0x98] sm:$0xf]
    %v929 = vld [vmem:[%s5 + $0x9c] sm:$0xf]
    %v930 = vld [vmem:[%s5 + $0xa0] sm:$0xf]
    %v931 = vld [vmem:[%s5 + $0xa4] sm:$0xf]
    %v932 = vld [vmem:[%s5 + $0xa8] sm:$0xf]
    %v933 = vld [vmem:[%s5 + $0xac] sm:$0xf]
    %v934 = vld [vmem:[%s5 + $0xb0] sm:$0xf]
    %v935 = vld [vmem:[%s5 + $0xb4] sm:$0xf]
    %v936 = vld [vmem:[%s5 + $0xb8] sm:$0xf]
    %v937 = vld [vmem:[%s5 + $0xbc] sm:$0xf]
    %v938 = vld [vmem:[%s5 + $0xc0] sm:$0xf]
    %v939 = vld [vmem:[%s5 + $0xc4] sm:$0xf]
    %v940 = vld [vmem:[%s5 + $0xc8] sm:$0xf]
    %v941 = vld [vmem:[%s5 + $0xcc] sm:$0xf]
    %v942 = vld [vmem:[%s5 + $0xd0] sm:$0xf]
    %v943 = vld [vmem:[%s5 + $0xd4] sm:$0xf]
    %v944 = vld [vmem:[%s5 + $0xd8] sm:$0xf]
    %v945 = vld [vmem:[%s5 + $0xdc] sm:$0xf]
    %v946 = vld [vmem:[%s5 + $0xe0] sm:$0xf]
    %v947 = vld [vmem:[%s5 + $0xe4] sm:$0xf]
    %v948 = vld [vmem:[%s5 + $0xe8] sm:$0xf]
    %v949 = vld [vmem:[%s5 + $0xec] sm:$0xf]
    %v950 = vld [vmem:[%s5 + $0xf0] sm:$0xf]
    %v951 = vld [vmem:[%s5 + $0xf4] sm:$0xf]
    %v952 = vld [vmem:[%s5 + $0xf8] sm:$0xf]
    %v953 = vld [vmem:[%s5 + $0xfc] sm:$0xf]
    %v954 = vld [vmem:[%s6] sm:$0x1]
    %v956 = vlaneseq
    %v957 = vshrl.u32 %v956, 7
    %v958 = vsub.s32 0, %v957
    %v959 = vrot.slane %v954, %v958
    %v1025 = vunpack.c.l.b16 %v890
    %v1026 = vunpack.c.l.b16 %v891
    %v1027 = vunpack.c.l.b16 %v892
    %v1028 = vunpack.c.l.b16 %v893
    %v1029 = vunpack.c.l.b16 %v894
    %v1030 = vunpack.c.l.b16 %v895
    %v1031 = vunpack.c.l.b16 %v896
    %v1032 = vunpack.c.l.b16 %v897
    %v1033 = vunpack.c.l.b16 %v898
    %v1034 = vunpack.c.l.b16 %v899
    %v1035 = vunpack.c.l.b16 %v900
    %v1036 = vunpack.c.l.b16 %v901
    %v1037 = vunpack.c.l.b16 %v902
    %v1038 = vunpack.c.l.b16 %v903
    %v1039 = vunpack.c.l.b16 %v904
    %v1040 = vunpack.c.l.b16 %v905
    %v1041 = vunpack.c.l.b16 %v906
    %v1042 = vunpack.c.l.b16 %v907
    %v1043 = vunpack.c.l.b16 %v908
    %v1044 = vunpack.c.l.b16 %v909
    %v1045 = vunpack.c.l.b16 %v910
    %v1046 = vunpack.c.l.b16 %v911
    %v1047 = vunpack.c.l.b16 %v912
    %v1048 = vunpack.c.l.b16 %v913
    %v1049 = vunpack.c.l.b16 %v914
    %v1050 = vunpack.c.l.b16 %v915
    %v1051 = vunpack.c.l.b16 %v916
    %v1052 = vunpack.c.l.b16 %v917
    %v1053 = vunpack.c.l.b16 %v918
    %v1054 = vunpack.c.l.b16 %v919
    %v1055 = vunpack.c.l.b16 %v920
    %v1056 = vunpack.c.l.b16 %v921
    %v1057 = vunpack.c.l.b16 %v922
    %v1058 = vunpack.c.l.b16 %v923
    %v1059 = vunpack.c.l.b16 %v924
    %v1060 = vunpack.c.l.b16 %v925
    %v1061 = vunpack.c.l.b16 %v926
    %v1062 = vunpack.c.l.b16 %v927
    %v1063 = vunpack.c.l.b16 %v928
    %v1064 = vunpack.c.l.b16 %v929
    %v1065 = vunpack.c.l.b16 %v930
    %v1066 = vunpack.c.l.b16 %v931
    %v1067 = vunpack.c.l.b16 %v932
    %v1068 = vunpack.c.l.b16 %v933
    %v1069 = vunpack.c.l.b16 %v934
    %v1070 = vunpack.c.l.b16 %v935
    %v1071 = vunpack.c.l.b16 %v936
    %v1072 = vunpack.c.l.b16 %v937
    %v1073 = vunpack.c.l.b16 %v938
    %v1074 = vunpack.c.l.b16 %v939
    %v1075 = vunpack.c.l.b16 %v940
    %v1076 = vunpack.c.l.b16 %v941
    %v1077 = vunpack.c.l.b16 %v942
    %v1078 = vunpack.c.l.b16 %v943
    %v1079 = vunpack.c.l.b16 %v944
    %v1080 = vunpack.c.l.b16 %v945
    %v1081 = vunpack.c.l.b16 %v946
    %v1082 = vunpack.c.l.b16 %v947
    %v1083 = vunpack.c.l.b16 %v948
    %v1084 = vunpack.c.l.b16 %v949
    %v1085 = vunpack.c.l.b16 %v950
    %v1086 = vunpack.c.l.b16 %v951
    %v1087 = vunpack.c.l.b16 %v952
    %v1088 = vunpack.c.l.b16 %v953
    %v1089 = vpack.c.b16 %v1026, %v1025
    %v1090 = vpack.c.b16 %v1028, %v1027
    %v1091 = vpack.c.b16 %v1030, %v1029
    %v1092 = vpack.c.b16 %v1032, %v1031
    %v1093 = vpack.c.b16 %v1034, %v1033
    %v1094 = vpack.c.b16 %v1036, %v1035
    %v1095 = vpack.c.b16 %v1038, %v1037
    %v1096 = vpack.c.b16 %v1040, %v1039
    %v1097 = vpack.c.b16 %v1042, %v1041
    %v1098 = vpack.c.b16 %v1044, %v1043
    %v1099 = vpack.c.b16 %v1046, %v1045
    %v1100 = vpack.c.b16 %v1048, %v1047
    %v1101 = vpack.c.b16 %v1050, %v1049
    %v1102 = vpack.c.b16 %v1052, %v1051
    %v1103 = vpack.c.b16 %v1054, %v1053
    %v1104 = vpack.c.b16 %v1056, %v1055
    %v1105 = vpack.c.b16 %v1058, %v1057
    %v1106 = vpack.c.b16 %v1060, %v1059
    %v1107 = vpack.c.b16 %v1062, %v1061
    %v1108 = vpack.c.b16 %v1064, %v1063
    %v1109 = vpack.c.b16 %v1066, %v1065
    %v1110 = vpack.c.b16 %v1068, %v1067
    %v1111 = vpack.c.b16 %v1070, %v1069
    %v1112 = vpack.c.b16 %v1072, %v1071
    %v1113 = vpack.c.b16 %v1074, %v1073
    %v1114 = vpack.c.b16 %v1076, %v1075
    %v1115 = vpack.c.b16 %v1078, %v1077
    %v1116 = vpack.c.b16 %v1080, %v1079
    %v1117 = vpack.c.b16 %v1082, %v1081
    %v1118 = vpack.c.b16 %v1084, %v1083
    %v1119 = vpack.c.b16 %v1086, %v1085
    %v1120 = vpack.c.b16 %v1088, %v1087
    %1153 = vmatprep.subr.bf16.mxu0 0
    %1154 = vmatpush1.bf16.msra.mxu0 %v1089
    %1155 = vmatprep.subr.bf16.mxu0 0
    %1156 = vmatpush1.bf16.msra.mxu0 %v1090
    %1157 = vmatprep.subr.bf16.mxu0 0
    %1158 = vmatpush1.bf16.msra.mxu0 %v1091
    %1159 = vmatprep.subr.bf16.mxu0 0
    %1160 = vmatpush1.bf16.msra.mxu0 %v1092
    %1161 = vmatprep.subr.bf16.mxu0 0
    %1162 = vmatpush1.bf16.msra.mxu0 %v1093
    %1163 = vmatprep.subr.bf16.mxu0 0
    %1164 = vmatpush1.bf16.msra.mxu0 %v1094
    %1165 = vmatprep.subr.bf16.mxu0 0
    %1166 = vmatpush1.bf16.msra.mxu0 %v1095
    %1167 = vmatprep.subr.bf16.mxu0 0
    %1168 = vmatpush1.bf16.msra.mxu0 %v1096
    %1169 = vmatprep.subr.bf16.mxu0 0
    %1170 = vmatpush1.bf16.msra.mxu0 %v1097
    %1171 = vmatprep.subr.bf16.mxu0 0
    %1172 = vmatpush1.bf16.msra.mxu0 %v1098
    %1173 = vmatprep.subr.bf16.mxu0 0
    %1174 = vmatpush1.bf16.msra.mxu0 %v1099
    %1175 = vmatprep.subr.bf16.mxu0 0
    %1176 = vmatpush1.bf16.msra.mxu0 %v1100
    %1177 = vmatprep.subr.bf16.mxu0 0
    %1178 = vmatpush1.bf16.msra.mxu0 %v1101
    %1179 = vmatprep.subr.bf16.mxu0 0
    %1180 = vmatpush1.bf16.msra.mxu0 %v1102
    %1181 = vmatprep.subr.bf16.mxu0 0
    %1182 = vmatpush1.bf16.msra.mxu0 %v1103
    %1183 = vmatprep.subr.bf16.mxu0 0
    %1184 = vmatpush1.bf16.msra.mxu0 %v1104
    %1185 = vmatprep.mubr.bf16.mxu0 %v887
    %1186 = vmatmul.mubr.bf16.gmra.mrb[0].mxu0 %v886
    %v1187 = vpop.f32.mrb[0].mxu0
    %v1188 = vadd.f32 %v959, %v1187
    %v1189 = vpop.f32.mrb[0].mxu0
    %v1190 = vpop.f32.mrb[0].mxu0
    %v1191 = vpop.f32.mrb[0].mxu0
    %1192 = vdwg.mxu0
    %1193 = vmatprep.subr.bf16.mxu0 0
    %1194 = vmatpush1.bf16.msra.mxu0 %v1105
    %1195 = vmatprep.subr.bf16.mxu0 0
    %1196 = vmatpush1.bf16.msra.mxu0 %v1106
    %1197 = vmatprep.subr.bf16.mxu0 0
    %1198 = vmatpush1.bf16.msra.mxu0 %v1107
    %1199 = vmatprep.subr.bf16.mxu0 0
    %1200 = vmatpush1.bf16.msra.mxu0 %v1108
    %1201 = vmatprep.subr.bf16.mxu0 0
    %1202 = vmatpush1.bf16.msra.mxu0 %v1109
    %1203 = vmatprep.subr.bf16.mxu0 0
    %1204 = vmatpush1.bf16.msra.mxu0 %v1110
    %1205 = vmatprep.subr.bf16.mxu0 0
    %1206 = vmatpush1.bf16.msra.mxu0 %v1111
    %1207 = vmatprep.subr.bf16.mxu0 0
    %1208 = vmatpush1.bf16.msra.mxu0 %v1112
    %1209 = vmatprep.subr.bf16.mxu0 0
    %1210 = vmatpush1.bf16.msra.mxu0 %v1113
    %1211 = vmatprep.subr.bf16.mxu0 0
    %1212 = vmatpush1.bf16.msra.mxu0 %v1114
    %1213 = vmatprep.subr.bf16.mxu0 0
    %1214 = vmatpush1.bf16.msra.mxu0 %v1115
    %1215 = vmatprep.subr.bf16.mxu0 0
    %1216 = vmatpush1.bf16.msra.mxu0 %v1116
    %1217 = vmatprep.subr.bf16.mxu0 0
    %1218 = vmatpush1.bf16.msra.mxu0 %v1117
    %1219 = vmatprep.subr.bf16.mxu0 0
    %1220 = vmatpush1.bf16.msra.mxu0 %v1118
    %1221 = vmatprep.subr.bf16.mxu0 0
    %1222 = vmatpush1.bf16.msra.mxu0 %v1119
    %1223 = vmatprep.subr.bf16.mxu0 0
    %1224 = vmatpush1.bf16.msra.mxu0 %v1120
    %1225 = vmatprep.mubr.bf16.mxu0 %v889
    %1226 = vmatmul.mubr.bf16.gmra.mrb[0].mxu0 %v888
    %v1227 = vpop.f32.mrb[0].mxu0
    %v1228 = vadd.f32 %v1188, %v1227
    %v1229 = vpop.f32.mrb[0].mxu0
    %v1230 = vpop.f32.mrb[0].mxu0
    %v1231 = vpop.f32.mrb[0].mxu0
    %1232 = vdwg.mxu0
    %v1233 = vtanh.pop %v1228
    %vm1234 = vcmask 130048
    %1235 = vst.msk [vmem:[#allocation5] sm:$0xff] %vm1234, %v1233
    // Predicated region
    $region34: #{generator_forward.1} parent=1 // pred_check
      _
    $region35: #{generator_forward.1} parent=1 // pred_check_branch
      %1237 = sbr.rel (0) target = $region37
    $region36: #{generator_forward.1} parent=1 // pred_region
      %s1239 = ssub.s32 128, 128
      %1240 = vsyncadd [#allocation4], %s1239
      %s1242 = sshll.u32 [#allocation5], 4
      %s1243 = int_to_ptr.vmem [resolvable:$true] %s1242
      %1245 = dma.vmem_to_hbm [thread:$0]  %s1243, 128, %s7, [#allocation4]
    $region37: #{generator_forward.1} parent=1 // pred_fallthru
      _
    // Predicated region
    $region38: #{generator_forward.1} parent=1 // pred_check
      _
    $region39: #{generator_forward.1} parent=1 // pred_check_branch
      %1247 = sbr.rel (0) target = $region41
    $region40: #{generator_forward.1} parent=1 // pred_region
      %1248 = dma.done [#allocation4], 128
    $region41: #{generator_forward.1} parent=1 // pred_fallthru
      _
    %1249 = vsyncpa [#allocation3], 1
    %1250 = vsyncpa [#allocation4], 1

</llo_original>
